<compile_context>
chip_gen: v7x
topology: tpu7x:2x2x1
jax: 0.10.0
libtpu: 0.0.40
codegen_flags: <defaults>
</compile_context>

<pallas_src>
import functools
import math

import jax
import jax.numpy as jnp
from jax.experimental import pallas as pl
from jax.experimental.pallas import tpu as pltpu

_LANES = 128


def _cdiv(a, b):
    return -(-a // b)


def _round_up(x, m):
    return _cdiv(x, m) * m


def _choose_rows_per_tile(s_rows, c, itemsize, rows_cap=None):
    """Rows (groups of 128 lanes) of the spatial axis per grid step."""
    # Double-buffered DMA tiles (score + int32 labels) per row of 128 lanes.
    dma_per_row = 2 * _LANES * (c * itemsize + 4)
    # Live f32 temporaries in the kernel body (upcast score, onehot, products).
    tmp_per_row = 16 * _LANES * c
    budget = 24 * 1024 * 1024
    try:  # right-size for the actual chip (v7x has only 64 MiB / core)
        budget = min(budget, int(pltpu.get_tpu_info().vmem_capacity_bytes) // 3)
    except Exception:
        pass
    ts = budget // (dma_per_row + tmp_per_row)
    if rows_cap is not None:
        ts = min(ts, rows_cap)
    ts = max(8, (ts // 8) * 8)
    if ts >= s_rows:
        return int(s_rows)          # full-dim block is always a legal shape
    return int(ts)


def _dice_partials_kernel(score_ref, tgt_ref, inter_ref, ysum_ref, zsum_ref,
                          *, apply_softmax, needs_mask):
    """One (batch, partition, spatial-tile) step.

    score_ref: (1, C, TS, 128)  probabilities (or logits if apply_softmax)
    tgt_ref:   (1, 1, TS, 128)  int32 labels, -1 marks padding
    *_ref:     (1, 1, C, 128)   per-(batch, partition) lane accumulators
    """
    t = pl.program_id(2)

    @pl.when(t == 0)
    def _init():
        inter_ref[...] = jnp.zeros_like(inter_ref)
        ysum_ref[...] = jnp.zeros_like(ysum_ref)
        zsum_ref[...] = jnp.zeros_like(zsum_ref)

    score = score_ref[0].astype(jnp.float32)          # (C, TS, 128)
    tgt = tgt_ref[0, 0]                               # (TS, 128) int32

    if apply_softmax:
        m = jnp.max(score, axis=0, keepdims=True)     # class axis = outer axis
        e = jnp.exp(score - m)                        # EUP
        denom = jnp.sum(e, axis=0, keepdims=True)
        score = e * pl.reciprocal(denom, approx=True) # EUP, frees VALU slot

    if needs_mask:
        # Only emitted when a padded / garbage tail actually exists.
        score = jnp.where((tgt >= 0)[None], score, 0.0)

    cls = jax.lax.broadcasted_iota(jnp.int32, score.shape, 0)
    onehot = (tgt[None] == cls).astype(jnp.float32)   # (C, TS, 128)

    inter_ref[0, 0] += jnp.sum(score * onehot, axis=1)    # (C, 128)
    ysum_ref[0, 0] += jnp.sum(onehot, axis=1)
    zsum_ref[0, 0] += jnp.sum(score * score, axis=1)


def dice_loss(inputs, target, n_classes, weight=None, softmax=False,
              rows_per_tile=None):
    """Pallas equivalent of DiceLoss(n_classes).forward(inputs, target, weight, softmax)."""
    B, C = int(inputs.shape[0]), int(inputs.shape[1])
    assert C == n_classes, f"predict C={C} != n_classes={n_classes}"
    hw = int(math.prod(inputs.shape[2:]))
    assert int(math.prod(target.shape)) == B * hw, \
        "predict & target shape do not match"

    itemsize = jnp.dtype(inputs.dtype).itemsize
    S = _cdiv(hw, _LANES)                 # spatial rows of 128 lanes
    hw_cols = S * _LANES

    TS = _choose_rows_per_tile(S, C, itemsize, rows_per_tile)
    nt = _cdiv(S, TS)
    # Prefer an even tile count so the 2-way spatial partition (keeps both
    # v7x TensorCores busy when B == 1) never produces fully OOB blocks.
    if nt >= 2 and nt % 2 == 1:
        ts_new = max(8, _round_up(_cdiv(S, nt + 1), 8))
        if ts_new < TS:
            TS, nt = ts_new, _cdiv(S, ts_new)
    NP = 2 if (nt >= 2 and nt % 2 == 0) else 1
    T = nt // NP
    S_lab = nt * TS                       # label rows incl. row padding

    # Scores: layout-preserving split of the spatial axis into (S, 128).
    # Only pads (one copy) when hw is not already 128-aligned.
    score = inputs.reshape(B, C, hw)
    if hw_cols != hw:
        score = jnp.pad(score, ((0, 0), (0, 0), (0, hw_cols - hw)))
    score = score.reshape(B, C, S, _LANES)

    # Labels (tiny): int32, padded with -1 over the 128-column tail and any
    # partial row tile, so padded positions never match a class id.
    tgt = target.reshape(B, hw).astype(jnp.int32)
    if S_lab * _LANES != hw:
        tgt = jnp.pad(tgt, ((0, 0), (0, S_lab * _LANES - hw)),
                      constant_values=-1)
    tgt = tgt.reshape(B, 1, S_lab, _LANES)

    row_garbage = (nt * TS != S)          # score edge block has garbage rows
    col_pad = (hw_cols != hw)
    needs_mask = row_garbage or (bool(softmax) and col_pad)

    # Right-size scoped VMEM from actual usage (v7x has only 64 MiB / core).
    tile_elems = C * TS * _LANES
    vmem_bytes = (2 * (tile_elems * itemsize + TS * _LANES * 4)   # dbl-buf in
                  + 16 * tile_elems                               # f32 temps
                  + 2 * 3 * C * _LANES * 4                        # accumulators
                  + (4 << 20))                                    # slack
    vmem_bytes = int(min(max(vmem_bytes, 16 << 20), 56 << 20))

    out_sds = jax.ShapeDtypeStruct((B, NP, C, _LANES), jnp.float32)
    cost = pl.CostEstimate(
        flops=8 * B * C * hw,
        transcendentals=(B * C * hw) if softmax else 0,
        bytes_accessed=(B * C * hw * itemsize + B * hw * 4
                        + 3 * B * NP * C * _LANES * 4),
    )

    kernel = functools.partial(_dice_partials_kernel,
                               apply_softmax=bool(softmax),
                               needs_mask=needs_mask)
    inter_p, y_p, z_p = pl.pallas_call(
        kernel,
        out_shape=(out_sds, out_sds, out_sds),
        grid=(B, NP, T),
        in_specs=[
            pl.BlockSpec((1, C, TS, _LANES), lambda b, p, t: (b, 0, p * T + t, 0)),
            pl.BlockSpec((1, 1, TS, _LANES), lambda b, p, t: (b, 0, p * T + t, 0)),
        ],
        out_specs=(
            pl.BlockSpec((1, 1, C, _LANES), lambda b, p, t: (b, p, 0, 0)),
            pl.BlockSpec((1, 1, C, _LANES), lambda b, p, t: (b, p, 0, 0)),
            pl.BlockSpec((1, 1, C, _LANES), lambda b, p, t: (b, p, 0, 0)),
        ),
        compiler_params=pltpu.CompilerParams(
            dimension_semantics=("parallel", "parallel", "arbitrary"),
            vmem_limit_bytes=vmem_bytes,
        ),
        cost_estimate=cost,
    )(score, tgt)

    # Tiny finalize in plain JAX: reduce batch / partition / lanes -> (C,).
    intersect = jnp.sum(inter_p, axis=(0, 1, 3))
    y_sum = jnp.sum(y_p, axis=(0, 1, 3))
    z_sum = jnp.sum(z_p, axis=(0, 1, 3))

    smooth = jnp.float32(1e-5)
    dice = 1.0 - (2.0 * intersect + smooth) / (z_sum + y_sum + smooth)
    if weight is None:
        w = jnp.ones((n_classes,), jnp.float32)
    else:
        w = jnp.asarray(weight, jnp.float32)
    # Note: class_wise_dice (host-side .item() bookkeeping in the torch code)
    # does not affect the returned loss and is not reproduced.
    return jnp.sum(dice * w) / n_classes


def _reference_dice_loss(inputs, target, n_classes, weight=None, softmax=False):
    """Pure-JAX mirror of the PyTorch DiceLoss.forward (for verification)."""
    if softmax:
        inputs = jax.nn.softmax(inputs, axis=1)
    target_oh = jax.nn.one_hot(target, n_classes, axis=1, dtype=jnp.float32)
    if weight is None:
        weight = [1.0] * n_classes
    smooth = 1e-5
    loss = 0.0
    for i in range(n_classes):
        s = inputs[:, i].astype(jnp.float32)
        t = target_oh[:, i]
        intersect = jnp.sum(s * t)
        y_sum = jnp.sum(t * t)
        z_sum = jnp.sum(s * s)
        dice = 1.0 - (2.0 * intersect + smooth) / (z_sum + y_sum + smooth)
        loss = loss + dice * weight[i]
    return loss / n_classes


if __name__ == "__main__":
    key = jax.random.PRNGKey(0)
    k1, k2, k3, k4, k5, k6 = jax.random.split(key, 6)

    # Cases 1-3: small 128-aligned shapes (hw = 256), C = 4.
    B, C, H, W = 2, 4, 16, 16
    logits = jax.random.normal(k1, (B, C, H, W), dtype=jnp.float32)
    target = jax.random.randint(k2, (B, H, W), 0, C, dtype=jnp.int32)
    probs = jax.nn.softmax(logits, axis=1)

    checks = [
        (probs, target, C, dict(softmax=False, weight=None), 1e-5, 1e-6),
        (logits, target, C, dict(softmax=True, weight=None), 5e-3, 1e-4),
        (probs, target, C, dict(softmax=False, weight=[0.5, 1.0, 1.5, 2.0]),
         1e-5, 1e-6),
    ]

    # Case 4: multi-tile accumulation + 2-way spatial partition (B == 1).
    B2, C2, H2 = 1, 3, 64
    probs2 = jax.nn.softmax(
        jax.random.normal(k3, (B2, C2, H2, H2), dtype=jnp.float32), axis=1)
    target2 = jax.random.randint(k4, (B2, H2, H2), 0, C2, dtype=jnp.int32)
    checks.append((probs2, target2, C2,
                   dict(softmax=False, weight=None, rows_per_tile=8),
                   1e-5, 1e-6))

    # Case 5: hw not 128-aligned + partial row tile + in-kernel softmax.
    B3, C3, H3 = 2, 4, 40      # hw = 1600 -> 13 rows of 128 (+64 pad cols)
    logits3 = jax.random.normal(k5, (B3, C3, H3, H3), dtype=jnp.float32)
    target3 = jax.random.randint(k6, (B3, H3, H3), 0, C3, dtype=jnp.int32)
    checks.append((logits3, target3, C3,
                   dict(softmax=True, weight=None, rows_per_tile=8),
                   5e-3, 1e-4))

    for inp, tg, ncls, kw, rtol, atol in checks:
        loss = dice_loss(inp, tg, ncls, **kw)
        jax.block_until_ready(loss)
        ref_kw = {k: v for k, v in kw.items() if k != "rows_per_tile"}
        ref = _reference_dice_loss(inp, tg, ncls, **ref_kw)
        assert jnp.allclose(loss, ref, rtol=rtol, atol=atol), (kw, loss, ref)

    print("KERNEL_OK")
</pallas_src>

<mosaic_0001>
module attributes {stable_mosaic.version = 11 : i64} {
  func.func @_dice_partials_kernel(%arg0: i32, %arg1: i32, %arg2: i32, %arg3: memref<1x4x2x128xf32, #tpu.memory_space<vmem>>, %arg4: memref<1x1x2x128xi32, #tpu.memory_space<vmem>>, %arg5: memref<1x1x4x128xf32, #tpu.memory_space<vmem>>, %arg6: memref<1x1x4x128xf32, #tpu.memory_space<vmem>>, %arg7: memref<1x1x4x128xf32, #tpu.memory_space<vmem>>) attributes {dimension_semantics = [#tpu.dimension_semantics<parallel>, #tpu.dimension_semantics<parallel>, #tpu.dimension_semantics<arbitrary>], iteration_bounds = array<i64: 2, 1, 1>, scalar_prefetch = 0 : i64, scratch_operands = 0 : i64, tpu.core_type = #tpu.core_type<tc>, window_params = [{transform_indices = @transform_0, window_bounds = array<i64: 1, 4, 2, 128>}, {transform_indices = @transform_1, window_bounds = array<i64: 1, 1, 2, 128>}, {transform_indices = @transform_2, window_bounds = array<i64: 1, 1, 4, 128>}, {transform_indices = @transform_3, window_bounds = array<i64: 1, 1, 4, 128>}, {transform_indices = @transform_4, window_bounds = array<i64: 1, 1, 4, 128>}]} {
    %c0_i32 = arith.constant 0 : i32
    %0 = arith.cmpi eq, %arg2, %c0_i32 : i32
    %1 = arith.extui %0 : i1 to i32
    %c0_i32_0 = arith.constant 0 : i32
    %2 = arith.cmpi ne, %1, %c0_i32_0 : i32
    scf.if %2 {
      %cst_34 = arith.constant 0.000000e+00 : f32
      %36 = vector.broadcast %cst_34 : f32 to vector<1x1x4x128xf32>
      %c0_35 = arith.constant 0 : index
      %c0_36 = arith.constant 0 : index
      %c0_37 = arith.constant 0 : index
      %c0_38 = arith.constant 0 : index
      %37 = vector.load %arg5[%c0_35, %c0_36, %c0_37, %c0_38] : memref<1x1x4x128xf32, #tpu.memory_space<vmem>>, vector<1x1x4x128xf32>
      tpu.vector_store %arg5[%c0_35, %c0_36, %c0_37, %c0_38], %36 {strides = array<i32>} : memref<1x1x4x128xf32, #tpu.memory_space<vmem>>, vector<1x1x4x128xf32>,
      %cst_39 = arith.constant 0.000000e+00 : f32
      %38 = vector.broadcast %cst_39 : f32 to vector<1x1x4x128xf32>
      %c0_40 = arith.constant 0 : index
      %c0_41 = arith.constant 0 : index
      %c0_42 = arith.constant 0 : index
      %c0_43 = arith.constant 0 : index
      %39 = vector.load %arg6[%c0_40, %c0_41, %c0_42, %c0_43] : memref<1x1x4x128xf32, #tpu.memory_space<vmem>>, vector<1x1x4x128xf32>
      tpu.vector_store %arg6[%c0_40, %c0_41, %c0_42, %c0_43], %38 {strides = array<i32>} : memref<1x1x4x128xf32, #tpu.memory_space<vmem>>, vector<1x1x4x128xf32>,
      %cst_44 = arith.constant 0.000000e+00 : f32
      %40 = vector.broadcast %cst_44 : f32 to vector<1x1x4x128xf32>
      %c0_45 = arith.constant 0 : index
      %c0_46 = arith.constant 0 : index
      %c0_47 = arith.constant 0 : index
      %c0_48 = arith.constant 0 : index
      %41 = vector.load %arg7[%c0_45, %c0_46, %c0_47, %c0_48] : memref<1x1x4x128xf32, #tpu.memory_space<vmem>>, vector<1x1x4x128xf32>
      tpu.vector_store %arg7[%c0_45, %c0_46, %c0_47, %c0_48], %40 {strides = array<i32>} : memref<1x1x4x128xf32, #tpu.memory_space<vmem>>, vector<1x1x4x128xf32>,
    } else {
    }
    %c0 = arith.constant 0 : index
    %c0_1 = arith.constant 0 : index
    %c0_2 = arith.constant 0 : index
    %c0_3 = arith.constant 0 : index
    %3 = vector.load %arg3[%c0, %c0_1, %c0_2, %c0_3] : memref<1x4x2x128xf32, #tpu.memory_space<vmem>>, vector<1x4x2x128xf32>
    %4 = vector.shape_cast %3 : vector<1x4x2x128xf32> to vector<4x2x128xf32>
    %c0_4 = arith.constant 0 : index
    %c0_5 = arith.constant 0 : index
    %c0_6 = arith.constant 0 : index
    %c0_7 = arith.constant 0 : index
    %5 = vector.load %arg4[%c0_4, %c0_5, %c0_6, %c0_7] : memref<1x1x2x128xi32, #tpu.memory_space<vmem>>, vector<1x1x2x128xi32>
    %6 = vector.shape_cast %5 : vector<1x1x2x128xi32> to vector<2x128xi32>
    %7 = tpu.iota {dimensions = array<i32: 0>} : vector<4x2x128xi32>
    %8 = vector.shape_cast %6 : vector<2x128xi32> to vector<1x2x128xi32>
    %9 = vector.broadcast %8 : vector<1x2x128xi32> to vector<4x2x128xi32>
    %10 = arith.cmpi eq, %9, %7 : vector<4x2x128xi32>
    %11 = arith.extui %10 : vector<4x2x128xi1> to vector<4x2x128xi32>
    %12 = arith.sitofp %11 : vector<4x2x128xi32> to vector<4x2x128xf32>
    %c0_8 = arith.constant 0 : index
    %c0_9 = arith.constant 0 : index
    %c0_10 = arith.constant 0 : index
    %c0_11 = arith.constant 0 : index
    %13 = vector.load %arg5[%c0_8, %c0_9, %c0_10, %c0_11] : memref<1x1x4x128xf32, #tpu.memory_space<vmem>>, vector<1x1x4x128xf32>
    %14 = vector.shape_cast %13 : vector<1x1x4x128xf32> to vector<4x128xf32>
    %15 = arith.mulf %4, %12 : vector<4x2x128xf32>
    %cst = arith.constant dense<0.000000e+00> : vector<4x128xf32>
    %16 = vector.multi_reduction <add>, %15, %cst [1] : vector<4x2x128xf32> to vector<4x128xf32>
    %17 = arith.addf %14, %16 : vector<4x128xf32>
    %c0_12 = arith.constant 0 : index
    %c0_13 = arith.constant 0 : index
    %c0_14 = arith.constant 0 : index
    %c0_15 = arith.constant 0 : index
    %18 = vector.load %arg5[%c0_12, %c0_13, %c0_14, %c0_15] : memref<1x1x4x128xf32, #tpu.memory_space<vmem>>, vector<1x1x4x128xf32>
    %19 = vector.shape_cast %18 : vector<1x1x4x128xf32> to vector<4x128xf32>
    %20 = vector.shape_cast %17 : vector<4x128xf32> to vector<1x1x4x128xf32>
    tpu.vector_store %arg5[%c0_12, %c0_13, %c0_14, %c0_15], %20 {strides = array<i32>} : memref<1x1x4x128xf32, #tpu.memory_space<vmem>>, vector<1x1x4x128xf32>,
    %c0_16 = arith.constant 0 : index
    %c0_17 = arith.constant 0 : index
    %c0_18 = arith.constant 0 : index
    %c0_19 = arith.constant 0 : index
    %21 = vector.load %arg6[%c0_16, %c0_17, %c0_18, %c0_19] : memref<1x1x4x128xf32, #tpu.memory_space<vmem>>, vector<1x1x4x128xf32>
    %22 = vector.shape_cast %21 : vector<1x1x4x128xf32> to vector<4x128xf32>
    %cst_20 = arith.constant dense<0.000000e+00> : vector<4x128xf32>
    %23 = vector.multi_reduction <add>, %12, %cst_20 [1] : vector<4x2x128xf32> to vector<4x128xf32>
    %24 = arith.addf %22, %23 : vector<4x128xf32>
    %c0_21 = arith.constant 0 : index
    %c0_22 = arith.constant 0 : index
    %c0_23 = arith.constant 0 : index
    %c0_24 = arith.constant 0 : index
    %25 = vector.load %arg6[%c0_21, %c0_22, %c0_23, %c0_24] : memref<1x1x4x128xf32, #tpu.memory_space<vmem>>, vector<1x1x4x128xf32>
    %26 = vector.shape_cast %25 : vector<1x1x4x128xf32> to vector<4x128xf32>
    %27 = vector.shape_cast %24 : vector<4x128xf32> to vector<1x1x4x128xf32>
    tpu.vector_store %arg6[%c0_21, %c0_22, %c0_23, %c0_24], %27 {strides = array<i32>} : memref<1x1x4x128xf32, #tpu.memory_space<vmem>>, vector<1x1x4x128xf32>,
    %c0_25 = arith.constant 0 : index
    %c0_26 = arith.constant 0 : index
    %c0_27 = arith.constant 0 : index
    %c0_28 = arith.constant 0 : index
    %28 = vector.load %arg7[%c0_25, %c0_26, %c0_27, %c0_28] : memref<1x1x4x128xf32, #tpu.memory_space<vmem>>, vector<1x1x4x128xf32>
    %29 = vector.shape_cast %28 : vector<1x1x4x128xf32> to vector<4x128xf32>
    %30 = arith.mulf %4, %4 : vector<4x2x128xf32>
    %cst_29 = arith.constant dense<0.000000e+00> : vector<4x128xf32>
    %31 = vector.multi_reduction <add>, %30, %cst_29 [1] : vector<4x2x128xf32> to vector<4x128xf32>
    %32 = arith.addf %29, %31 : vector<4x128xf32>
    %c0_30 = arith.constant 0 : index
    %c0_31 = arith.constant 0 : index
    %c0_32 = arith.constant 0 : index
    %c0_33 = arith.constant 0 : index
    %33 = vector.load %arg7[%c0_30, %c0_31, %c0_32, %c0_33] : memref<1x1x4x128xf32, #tpu.memory_space<vmem>>, vector<1x1x4x128xf32>
    %34 = vector.shape_cast %33 : vector<1x1x4x128xf32> to vector<4x128xf32>
    %35 = vector.shape_cast %32 : vector<4x128xf32> to vector<1x1x4x128xf32>
    tpu.vector_store %arg7[%c0_30, %c0_31, %c0_32, %c0_33], %35 {strides = array<i32>} : memref<1x1x4x128xf32, #tpu.memory_space<vmem>>, vector<1x1x4x128xf32>,
    return
  }
  func.func @transform_0(%arg0: i32, %arg1: i32, %arg2: i32) -> (i32, i32, i32, i32) {
    %c1_i32 = arith.constant 1 : i32
    %0 = arith.muli %arg1, %c1_i32 : i32
    %1 = arith.addi %0, %arg2 : i32
    %c0_i32 = arith.constant 0 : i32
    %c0_i32_0 = arith.constant 0 : i32
    %c0_i32_1 = arith.constant 0 : i32
    return %arg0, %c0_i32, %1, %c0_i32_0 : i32, i32, i32, i32
  }
  func.func @transform_1(%arg0: i32, %arg1: i32, %arg2: i32) -> (i32, i32, i32, i32) {
    %c1_i32 = arith.constant 1 : i32
    %0 = arith.muli %arg1, %c1_i32 : i32
    %1 = arith.addi %0, %arg2 : i32
    %c0_i32 = arith.constant 0 : i32
    %c0_i32_0 = arith.constant 0 : i32
    %c0_i32_1 = arith.constant 0 : i32
    return %arg0, %c0_i32, %1, %c0_i32_0 : i32, i32, i32, i32
  }
  func.func @transform_2(%arg0: i32, %arg1: i32, %arg2: i32) -> (i32, i32, i32, i32) {
    %c0_i32 = arith.constant 0 : i32
    %c0_i32_0 = arith.constant 0 : i32
    %c0_i32_1 = arith.constant 0 : i32
    return %arg0, %arg1, %c0_i32, %c0_i32_0 : i32, i32, i32, i32
  }
  func.func @transform_3(%arg0: i32, %arg1: i32, %arg2: i32) -> (i32, i32, i32, i32) {
    %c0_i32 = arith.constant 0 : i32
    %c0_i32_0 = arith.constant 0 : i32
    %c0_i32_1 = arith.constant 0 : i32
    return %arg0, %arg1, %c0_i32, %c0_i32_0 : i32, i32, i32, i32
  }
  func.func @transform_4(%arg0: i32, %arg1: i32, %arg2: i32) -> (i32, i32, i32, i32) {
    %c0_i32 = arith.constant 0 : i32
    %c0_i32_0 = arith.constant 0 : i32
    %c0_i32_1 = arith.constant 0 : i32
    return %arg0, %arg1, %c0_i32, %c0_i32_0 : i32, i32, i32, i32
  }
}

</mosaic_0001>

<llo_original>
// kernel: tpu_custom_call.1
$region0: #{tpu_custom_call.1}
  #allocation0 [shape = 'u32[]', space=smem, size = 0x4, offset = 0x4, fixed_abs, tag = 'smem constant byte address 0x4 - core index']
  #allocation1 [shape = 'u32[144,128]{1,0:T(1,128)}', space=vmem, size = 0x12000, scoped, tag = 'internal scratch']
  %s0 = inlined_call_operand.hbm [shape: f32[2,4,2,128], index: 0, kind: input, shape index: {}]
  %s1 = inlined_call_operand.hbm [shape: s32[2,1,2,128], index: 1, kind: input, shape index: {}]
  %s2 = inlined_call_operand.hbm [shape: f32[2,1,4,128], index: 2, kind: output, shape index: {0}]
  %s3 = inlined_call_operand.hbm [shape: f32[2,1,4,128], index: 3, kind: output, shape index: {1}]
  %s4 = inlined_call_operand.hbm [shape: f32[2,1,4,128], index: 4, kind: output, shape index: {2}]
  %5 = xla_tuple %s2, %s3, %s4
  %s6 = sld [smem:[#allocation0]]
  $region69: #{tpu_custom_call.1} parent=0
    _
  %s8 = ssub.s32 1, %s6
  %s9 = scalar_select 0, %s8, %s6
  $region1: #{tpu_custom_call.1} parent=0
    #allocation2 [shape = 'u8[8192]{0}', space=vmem, size = 0x2000, scoped, tag = 'input window, operand 0']
    #allocation3 [shape = 's32[2]{0}', space=sflag, size = 0x8, scoped, tag = 'scoped memory for tpu_custom_call.1']
    #allocation4 [shape = 's32[2]{0}', space=sflag, size = 0x8, scoped, tag = 'scoped memory for tpu_custom_call.1']
    #allocation5 [shape = 'u8[2048]{0}', space=vmem, size = 0x800, scoped, tag = 'input window, operand 1']
    #allocation6 [shape = 's32[2]{0}', space=sflag, size = 0x8, scoped, tag = 'scoped memory for tpu_custom_call.1']
    #allocation7 [shape = 'u8[4096]{0}', space=vmem, size = 0x1000, scoped, tag = 'output window, operand 0']
    #allocation8 [shape = 'u8[4096]{0}', space=vmem, size = 0x1000, scoped, tag = 'output window, operand 1']
    #allocation9 [shape = 's32[2]{0}', space=sflag, size = 0x8, scoped, tag = 'scoped memory for tpu_custom_call.1']
    #allocation10 [shape = 'u8[4096]{0}', space=vmem, size = 0x1000, scoped, tag = 'output window, operand 2']
    %10 = vsyncpa [#allocation3], 0
    %s11 = scalar_lea.sflag [#allocation3], 1
    %12 = vsyncpa %s11, 0
    %13 = vsyncpa [#allocation6], 0
    %s14 = scalar_lea.sflag [#allocation6], 1
    %15 = vsyncpa %s14, 0
    %16 = vsyncpa [#allocation4], 0
    %s17 = scalar_lea.sflag [#allocation4], 1
    %18 = vsyncpa %s17, 0
    %19 = vsyncpa [#allocation9], 0
    %s20 = scalar_lea.sflag [#allocation9], 1
    %21 = vsyncpa %s20, 0
    loop: start=0, step=1, limit=4
    $region2: #{tpu_custom_call.1} parent=1 // loop_pre_header
      _
    $region3: #{tpu_custom_call.1} parent=1 // loop_header
      %s23 = sphi 0, %s27
      %p24 = scmp.ge.s32.totalorder %s23, 4
      %s30 = sphi 0, %s49
      %s31 = sphi 0, %s45
      %s32 = sphi 0, %s41
      %s33 = sphi 0, %s30
      %s34 = sphi 0, %s31
      %s35 = sphi 0, %s32
      %s36 = sphi 0, %s33
      %s37 = sphi 0, %s34
      %s38 = sphi 0, %s35
      %s56 = sphi 0, %s58
      %s59 = sphi 0, %s56
      %s60 = sphi 0, %s59
      %s76 = sphi 0, %s60
      %s86 = sphi 0, %s88
      %s89 = sphi 0, %s86
      %s90 = sphi 0, %s89
      %s106 = sphi 0, %s90
      %s114 = sphi 0, %s116
      %s117 = sphi 0, %s114
      %s118 = sphi 0, %s117
      %s134 = sphi 0, %s118
      %s142 = sphi 0, %s144
      %s145 = sphi 0, %s142
      %s146 = sphi 0, %s145
      %s162 = sphi 0, %s146
      %s170 = sphi 0, %s172
      %s173 = sphi 0, %s170
      %s174 = sphi 0, %s173
      %s190 = sphi 0, %s174
    $region4: #{tpu_custom_call.1} parent=1 // loop_header_branch
      %26 = sbr.rel (%p24) target = $region8
    $region5: #{tpu_custom_call.1} parent=1 // loop_body
      %s28 = ssub.s32 %s23, 1
      %s29 = ssub.s32 %s23, 2
      %s39 = sadd.s32 1, %s32
      %p40 = scmp.ge.s32.totalorder %s39, 1
      %s41 = scalar_select %p40, 0, %s39
      %s42 = sadd.s32 1, %s31
      %s43 = scalar_select %p40, %s42, %s31
      %p44 = scmp.ge.s32.totalorder %s43, 1
      %s45 = scalar_select %p44, 0, %s43
      %s46 = sadd.s32 1, %s30
      %s47 = scalar_select %p44, %s46, %s30
      %p48 = scmp.ge.s32.totalorder %s47, 2
      %s49 = scalar_select %p48, 0, %s47
      %s50 = sadd.s32 %s31, %s32
      %s51 = sadd.s32 %s45, %s41
      %s52 = ssub.s32 %s30, %s49
      %s53 = ssub.s32 %s50, %s51
      %s54 = sor.u32 %s52, %s53
      %p55 = scmp.eq.s32.totalorder %s54, 0
      %s57 = sadd.s32 %s56, 1
      %s58 = scalar_select %p55, %s56, %s57
      %p61 = pneg %p55
      %p62 = scmp.eq.s32.totalorder %s23, 1
      %p63 = por %p61, %p62
      %p64 = scmp.ne.s32.totalorder %s56, %s59
      %p65 = scmp.eq.s32.totalorder %s23, 0
      %p66 = por %p64, %p65
      %p67 = scmp.ne.s32.totalorder %s56, %s59
      %p68 = scmp.eq.s32.totalorder %s28, 1
      %p69 = por %p67, %p68
      %p70 = scmp.ne.s32.totalorder %s59, %s60
      %p71 = scmp.eq.s32.totalorder %s28, 0
      %p72 = por %p70, %p71
      %p73 = scmp.ne.s32.totalorder %s59, %s60
      %p74 = scmp.eq.s32.totalorder %s29, 1
      %p75 = por %p73, %p74
      %p77 = scmp.ne.s32.totalorder %s60, %s76
      %p78 = scmp.eq.s32.totalorder %s29, 0
      %p79 = por %p77, %p78
      %s80 = sadd.s32 %s31, %s32
      %s81 = sadd.s32 %s45, %s41
      %s82 = ssub.s32 %s30, %s49
      %s83 = ssub.s32 %s80, %s81
      %s84 = sor.u32 %s82, %s83
      %p85 = scmp.eq.s32.totalorder %s84, 0
      %s87 = sadd.s32 %s86, 1
      %s88 = scalar_select %p85, %s86, %s87
      %p91 = pneg %p85
      %p92 = scmp.eq.s32.totalorder %s23, 1
      %p93 = por %p91, %p92
      %p94 = scmp.ne.s32.totalorder %s86, %s89
      %p95 = scmp.eq.s32.totalorder %s23, 0
      %p96 = por %p94, %p95
      %p97 = scmp.ne.s32.totalorder %s86, %s89
      %p98 = scmp.eq.s32.totalorder %s28, 1
      %p99 = por %p97, %p98
      %p100 = scmp.ne.s32.totalorder %s89, %s90
      %p101 = scmp.eq.s32.totalorder %s28, 0
      %p102 = por %p100, %p101
      %p103 = scmp.ne.s32.totalorder %s89, %s90
      %p104 = scmp.eq.s32.totalorder %s29, 1
      %p105 = por %p103, %p104
      %p107 = scmp.ne.s32.totalorder %s90, %s106
      %p108 = scmp.eq.s32.totalorder %s29, 0
      %p109 = por %p107, %p108
      %s110 = ssub.s32 %s30, %s49
      %s111 = ssub.s32 %s31, %s45
      %s112 = sor.u32 %s110, %s111
      %p113 = scmp.eq.s32.totalorder %s112, 0
      %s115 = sadd.s32 %s114, 1
      %s116 = scalar_select %p113, %s114, %s115
      %p119 = pneg %p113
      %p120 = scmp.eq.s32.totalorder %s23, 1
      %p121 = por %p119, %p120
      %p122 = scmp.ne.s32.totalorder %s114, %s117
      %p123 = scmp.eq.s32.totalorder %s23, 0
      %p124 = por %p122, %p123
      %p125 = scmp.ne.s32.totalorder %s114, %s117
      %p126 = scmp.eq.s32.totalorder %s28, 1
      %p127 = por %p125, %p126
      %p128 = scmp.ne.s32.totalorder %s117, %s118
      %p129 = scmp.eq.s32.totalorder %s28, 0
      %p130 = por %p128, %p129
      %p131 = scmp.ne.s32.totalorder %s117, %s118
      %p132 = scmp.eq.s32.totalorder %s29, 1
      %p133 = por %p131, %p132
      %p135 = scmp.ne.s32.totalorder %s118, %s134
      %p136 = scmp.eq.s32.totalorder %s29, 0
      %p137 = por %p135, %p136
      %s138 = ssub.s32 %s30, %s49
      %s139 = ssub.s32 %s31, %s45
      %s140 = sor.u32 %s138, %s139
      %p141 = scmp.eq.s32.totalorder %s140, 0
      %s143 = sadd.s32 %s142, 1
      %s144 = scalar_select %p141, %s142, %s143
      %p147 = pneg %p141
      %p148 = scmp.eq.s32.totalorder %s23, 1
      %p149 = por %p147, %p148
      %p150 = scmp.ne.s32.totalorder %s142, %s145
      %p151 = scmp.eq.s32.totalorder %s23, 0
      %p152 = por %p150, %p151
      %p153 = scmp.ne.s32.totalorder %s142, %s145
      %p154 = scmp.eq.s32.totalorder %s28, 1
      %p155 = por %p153, %p154
      %p156 = scmp.ne.s32.totalorder %s145, %s146
      %p157 = scmp.eq.s32.totalorder %s28, 0
      %p158 = por %p156, %p157
      %p159 = scmp.ne.s32.totalorder %s145, %s146
      %p160 = scmp.eq.s32.totalorder %s29, 1
      %p161 = por %p159, %p160
      %p163 = scmp.ne.s32.totalorder %s146, %s162
      %p164 = scmp.eq.s32.totalorder %s29, 0
      %p165 = por %p163, %p164
      %s166 = ssub.s32 %s30, %s49
      %s167 = ssub.s32 %s31, %s45
      %s168 = sor.u32 %s166, %s167
      %p169 = scmp.eq.s32.totalorder %s168, 0
      %s171 = sadd.s32 %s170, 1
      %s172 = scalar_select %p169, %s170, %s171
      %p175 = pneg %p169
      %p176 = scmp.eq.s32.totalorder %s23, 1
      %p177 = por %p175, %p176
      %p178 = scmp.ne.s32.totalorder %s170, %s173
      %p179 = scmp.eq.s32.totalorder %s23, 0
      %p180 = por %p178, %p179
      %p181 = scmp.ne.s32.totalorder %s170, %s173
      %p182 = scmp.eq.s32.totalorder %s28, 1
      %p183 = por %p181, %p182
      %p184 = scmp.ne.s32.totalorder %s173, %s174
      %p185 = scmp.eq.s32.totalorder %s28, 0
      %p186 = por %p184, %p185
      %p187 = scmp.ne.s32.totalorder %s173, %s174
      %p188 = scmp.eq.s32.totalorder %s29, 1
      %p189 = por %p187, %p188
      %p191 = scmp.ne.s32.totalorder %s174, %s190
      %p192 = scmp.eq.s32.totalorder %s29, 0
      %p193 = por %p191, %p192
      %p194 = scmp.le.s32.totalorder 1, %s23
      %p195 = scmp.lt.s32.totalorder %s23, 3
      %p196 = pnand %p194, %p195
      %p197 = pneg %p196
      // Predicated region
      $region9: #{tpu_custom_call.1} parent=5 // pred_check
        _
      $region10: #{tpu_custom_call.1} parent=5 // pred_check_branch
        %199 = sbr.rel (%p196) target = $region12
      $region11: #{tpu_custom_call.1} parent=5 // pred_region
        %s200 = ssub.s32 %s23, 1
      $region12: #{tpu_custom_call.1} parent=5 // pred_fallthru
        _
      %p201 = scmp.lt.s32.totalorder %s23, 2
      // Predicated region
      $region13: #{tpu_custom_call.1} parent=5 // pred_check
        %p202 = pneg %p201
      $region14: #{tpu_custom_call.1} parent=5 // pred_check_branch
        %204 = sbr.rel (%p202) target = $region16
      $region15: #{tpu_custom_call.1} parent=5 // pred_region
        // Predicated region
        $region17: #{tpu_custom_call.1} parent=15 // pred_check
          %p205 = pneg %p66
        $region18: #{tpu_custom_call.1} parent=15 // pred_check_branch
          %207 = sbr.rel (%p205) target = $region20
        $region19: #{tpu_custom_call.1} parent=15 // pred_region
          %s208 = sand.u32 %s56, 1
          %s209 = scalar_lea.sflag [#allocation3], %s208
          %s210 = sand.u32 %s56, 1
          %s211 = smul.addr %s210, 8
          %s212 = scalar_lea.vmem [#allocation2], %s211
          %s213 = sadd.s32 %s31, %s32
          %s215 = ssub.s32 128, 128
          %216 = vsyncadd %s209, %s215
          %s217 = smul.addr %s30, 4
          %s218 = sadd.s32 %s213, %s217
          %s219 = smul.addr %s218, 32
          %s220 = scalar_lea.hbm %s0, %s219
          %s221 = sshll.u32 %s212, 4
          %s222 = int_to_ptr.vmem [resolvable:$true] %s221
          %227 = dma.hbm_to_vmem [thread:$0]  %s220, 128, %s222, %s209, 32, 32, 2
        $region20: #{tpu_custom_call.1} parent=15 // pred_fallthru
          _
        // Predicated region
        $region21: #{tpu_custom_call.1} parent=15 // pred_check
          %p228 = pneg %p96
        $region22: #{tpu_custom_call.1} parent=15 // pred_check_branch
          %230 = sbr.rel (%p228) target = $region24
        $region23: #{tpu_custom_call.1} parent=15 // pred_region
          %s231 = sand.u32 %s86, 1
          %s232 = scalar_lea.sflag [#allocation6], %s231
          %s233 = sand.u32 %s86, 1
          %s234 = smul.addr %s233, 2
          %s235 = scalar_lea.vmem [#allocation5], %s234
          %s236 = sadd.s32 %s31, %s32
          %s238 = ssub.s32 32, 32
          %239 = vsyncadd %s232, %s238
          %s240 = sadd.s32 %s236, %s30
          %s241 = smul.addr %s240, 32
          %s242 = scalar_lea.hbm %s1, %s241
          %s244 = sshll.u32 %s235, 4
          %s245 = int_to_ptr.vmem [resolvable:$true] %s244
          %247 = dma.hbm_to_vmem [thread:$0]  %s242, 32, %s245, %s232
        $region24: #{tpu_custom_call.1} parent=15 // pred_fallthru
          _
      $region16: #{tpu_custom_call.1} parent=5 // pred_fallthru
        _
      %p248 = scmp.le.s32.totalorder 1, %s23
      %p249 = scmp.lt.s32.totalorder %s23, 3
      %p250 = pnand %p248, %p249
      %p251 = pneg %p250
      // Predicated region
      $region25: #{tpu_custom_call.1} parent=5 // pred_check
        _
      $region26: #{tpu_custom_call.1} parent=5 // pred_check_branch
        %253 = sbr.rel (%p250) target = $region28
      $region27: #{tpu_custom_call.1} parent=5 // pred_region
        %s254 = ssub.s32 %s23, 1
        %s255 = sand.u32 %s59, 1
        %s256 = scalar_lea.sflag [#allocation3], %s255
        %s257 = sand.u32 %s59, 1
        %s258 = smul.addr %s257, 8
        %s259 = scalar_lea.vmem [#allocation2], %s258
        // Predicated region
        $region29: #{tpu_custom_call.1} parent=27 // pred_check
          %p260 = pneg %p72
        $region30: #{tpu_custom_call.1} parent=27 // pred_check_branch
          %262 = sbr.rel (%p260) target = $region32
        $region31: #{tpu_custom_call.1} parent=27 // pred_region
          %263 = dma.done %s256, 128
        $region32: #{tpu_custom_call.1} parent=27 // pred_fallthru
          _
        %s264 = sand.u32 %s89, 1
        %s265 = scalar_lea.sflag [#allocation6], %s264
        %s266 = sand.u32 %s89, 1
        %s267 = smul.addr %s266, 2
        %s268 = scalar_lea.vmem [#allocation5], %s267
        // Predicated region
        $region33: #{tpu_custom_call.1} parent=27 // pred_check
          %p269 = pneg %p102
        $region34: #{tpu_custom_call.1} parent=27 // pred_check_branch
          %271 = sbr.rel (%p269) target = $region36
        $region35: #{tpu_custom_call.1} parent=27 // pred_region
          %272 = dma.done %s265, 32
        $region36: #{tpu_custom_call.1} parent=27 // pred_fallthru
          _
        %s273 = sand.u32 %s59, 1
        %s274 = scalar_lea.sflag [#allocation3], %s273
        %s275 = sand.u32 %s59, 1
        %s276 = smul.addr %s275, 8
        %s277 = scalar_lea.vmem [#allocation2], %s276
        %p278 = pneg %p72
        %p279 = pneg %p69
        %s280 = sand.u32 %s89, 1
        %s281 = scalar_lea.sflag [#allocation6], %s280
        %s282 = sand.u32 %s89, 1
        %s283 = smul.addr %s282, 2
        %s284 = scalar_lea.vmem [#allocation5], %s283
        %p285 = pneg %p102
        %p286 = pneg %p99
        %p287 = pneg %p130
        %p288 = pneg %p127
        %s289 = sand.u32 %s117, 1
        %s290 = scalar_lea.sflag [#allocation4], %s289
        %s291 = sand.u32 %s117, 1
        %s292 = smul.addr %s291, 4
        %s293 = scalar_lea.vmem [#allocation7], %s292
        %p294 = pneg %p158
        %p295 = pneg %p155
        %s296 = sand.u32 %s28, 1
        %s297 = scalar_lea.sflag [#allocation9], %s296
        %s298 = sand.u32 %s145, 1
        %s299 = smul.addr %s298, 4
        %s300 = scalar_lea.vmem [#allocation8], %s299
        %p301 = pneg %p186
        %p302 = pneg %p183
        %s303 = sand.u32 %s28, 1
        %s304 = scalar_lea.sflag [#allocation9], %s303
        %s305 = sand.u32 %s173, 1
        %s306 = smul.addr %s305, 4
        %s307 = scalar_lea.vmem [#allocation10], %s306
        %s308 = sadd.s32 %s34, %s35
        %s309 = sadd.s32 %s34, %s35
        %p310 = scmp.eq.s32.totalorder %s35, 0
        // Predicated region
        $region37: #{tpu_custom_call.1} parent=27 // pred_check
          %p311 = pneg %p310
        $region38: #{tpu_custom_call.1} parent=27 // pred_check_branch
          %313 = sbr.rel (%p311) target = $region40
        $region39: #{tpu_custom_call.1} parent=27 // pred_region
          %314 = vst [vmem:[%s293] sm:$0xf] 0.0
          %315 = vst [vmem:[%s300] sm:$0xf] 0.0
          %316 = vst [vmem:[%s307] sm:$0xf] 0.0
        $region40: #{tpu_custom_call.1} parent=27 // pred_fallthru
          _
        %v317 = vld [vmem:[%s259] sm:$0x3]
        %v318 = vld [vmem:[%s259 + $0x2] sm:$0x3]
        %v319 = vld [vmem:[%s259 + $0x4] sm:$0x3]
        %v320 = vld [vmem:[%s259 + $0x6] sm:$0x3]
        %v321 = vld [vmem:[%s268] sm:$0x3]
        %vm322 = vcmp.eq.s32.totalorder %v321, 0
        %vm323 = vcmp.eq.s32.totalorder %v321, 1
        %vm324 = vcmp.eq.s32.totalorder %v321, 2
        %vm325 = vcmp.eq.s32.totalorder %v321, 3
        %v326 = vsel %vm322, 1, 0
        %v327 = vsel %vm323, 1, 0
        %v328 = vsel %vm324, 1, 0
        %v329 = vsel %vm325, 1, 0
        %v330 = vcvt.s32.f32 %v326
        %v331 = vcvt.s32.f32 %v327
        %v332 = vcvt.s32.f32 %v328
        %v333 = vcvt.s32.f32 %v329
        %v334 = vld [vmem:[%s293] sm:$0xf]
        %v335 = vmul.f32 %v317, %v330
        %v336 = vmul.f32 %v318, %v331
        %v337 = vmul.f32 %v319, %v332
        %v338 = vmul.f32 %v320, %v333
        %vm339 = vcmask 1041408
        %v340 = vsel %vm339, %v335, 0.0
        %v341 = vrot.slane %v340, 4
        %v342 = vadd.f32 %v340, %v341
        %v343 = vrot.slane %v342, 2
        %v344 = vadd.f32 %v342, %v343
        %v345 = vrot.slane %v344, 1
        %v346 = vadd.f32 %v344, %v345
        %v347 = vsel %vm339, %v336, 0.0
        %v348 = vrot.slane %v347, 4
        %v349 = vadd.f32 %v347, %v348
        %v350 = vrot.slane %v349, 2
        %v351 = vadd.f32 %v349, %v350
        %v352 = vrot.slane %v351, 1
        %v353 = vadd.f32 %v351, %v352
        %v354 = vsel %vm339, %v337, 0.0
        %v355 = vrot.slane %v354, 4
        %v356 = vadd.f32 %v354, %v355
        %v357 = vrot.slane %v356, 2
        %v358 = vadd.f32 %v356, %v357
        %v359 = vrot.slane %v358, 1
        %v360 = vadd.f32 %v358, %v359
        %v361 = vsel %vm339, %v338, 0.0
        %v362 = vrot.slane %v361, 4
        %v363 = vadd.f32 %v361, %v362
        %v364 = vrot.slane %v363, 2
        %v365 = vadd.f32 %v363, %v364
        %v366 = vrot.slane %v365, 1
        %v367 = vadd.f32 %v365, %v366
        %vm372 = vcmask 1041409
        %v373 = vsel %vm372, %v353, %v346
        %vm374 = vcmask 1042434
        %v375 = vsel %vm374, %v360, %v373
        %vm376 = vcmask 1043459
        %v377 = vsel %vm376, %v367, %v375
        %v379 = vadd.f32 %v334, %v377
        %380 = vst [vmem:[%s293] sm:$0xf] %v379
        %v381 = vld [vmem:[%s300] sm:$0xf]
        %v382 = vsel %vm339, %v330, 0.0
        %v383 = vrot.slane %v382, 4
        %v384 = vadd.f32 %v382, %v383
        %v385 = vrot.slane %v384, 2
        %v386 = vadd.f32 %v384, %v385
        %v387 = vrot.slane %v386, 1
        %v388 = vadd.f32 %v386, %v387
        %v389 = vsel %vm339, %v331, 0.0
        %v390 = vrot.slane %v389, 4
        %v391 = vadd.f32 %v389, %v390
        %v392 = vrot.slane %v391, 2
        %v393 = vadd.f32 %v391, %v392
        %v394 = vrot.slane %v393, 1
        %v395 = vadd.f32 %v393, %v394
        %v396 = vsel %vm339, %v332, 0.0
        %v397 = vrot.slane %v396, 4
        %v398 = vadd.f32 %v396, %v397
        %v399 = vrot.slane %v398, 2
        %v400 = vadd.f32 %v398, %v399
        %v401 = vrot.slane %v400, 1
        %v402 = vadd.f32 %v400, %v401
        %v403 = vsel %vm339, %v333, 0.0
        %v404 = vrot.slane %v403, 4
        %v405 = vadd.f32 %v403, %v404
        %v406 = vrot.slane %v405, 2
        %v407 = vadd.f32 %v405, %v406
        %v408 = vrot.slane %v407, 1
        %v409 = vadd.f32 %v407, %v408
        %v414 = vsel %vm372, %v395, %v388
        %v415 = vsel %vm374, %v402, %v414
        %v416 = vsel %vm376, %v409, %v415
        %v418 = vadd.f32 %v381, %v416
        %419 = vst [vmem:[%s300] sm:$0xf] %v418
        %v420 = vld [vmem:[%s307] sm:$0xf]
        %v421 = vmul.f32 %v317, %v317
        %v422 = vmul.f32 %v318, %v318
        %v423 = vmul.f32 %v319, %v319
        %v424 = vmul.f32 %v320, %v320
        %v425 = vsel %vm339, %v421, 0.0
        %v426 = vrot.slane %v425, 4
        %v427 = vadd.f32 %v425, %v426
        %v428 = vrot.slane %v427, 2
        %v429 = vadd.f32 %v427, %v428
        %v430 = vrot.slane %v429, 1
        %v431 = vadd.f32 %v429, %v430
        %v432 = vsel %vm339, %v422, 0.0
        %v433 = vrot.slane %v432, 4
        %v434 = vadd.f32 %v432, %v433
        %v435 = vrot.slane %v434, 2
        %v436 = vadd.f32 %v434, %v435
        %v437 = vrot.slane %v436, 1
        %v438 = vadd.f32 %v436, %v437
        %v439 = vsel %vm339, %v423, 0.0
        %v440 = vrot.slane %v439, 4
        %v441 = vadd.f32 %v439, %v440
        %v442 = vrot.slane %v441, 2
        %v443 = vadd.f32 %v441, %v442
        %v444 = vrot.slane %v443, 1
        %v445 = vadd.f32 %v443, %v444
        %v446 = vsel %vm339, %v424, 0.0
        %v447 = vrot.slane %v446, 4
        %v448 = vadd.f32 %v446, %v447
        %v449 = vrot.slane %v448, 2
        %v450 = vadd.f32 %v448, %v449
        %v451 = vrot.slane %v450, 1
        %v452 = vadd.f32 %v450, %v451
        %v457 = vsel %vm372, %v438, %v431
        %v458 = vsel %vm374, %v445, %v457
        %v459 = vsel %vm376, %v452, %v458
        %v461 = vadd.f32 %v420, %v459
        %462 = vst [vmem:[%s307] sm:$0xf] %v461
        %s463 = sand.u32 %s117, 1
        %s464 = scalar_lea.sflag [#allocation4], %s463
        %s465 = sand.u32 %s117, 1
        %s466 = smul.addr %s465, 4
        %s467 = scalar_lea.vmem [#allocation7], %s466
        %s468 = sand.u32 %s28, 1
        %s469 = scalar_lea.sflag [#allocation9], %s468
        %s470 = sand.u32 %s145, 1
        %s471 = smul.addr %s470, 4
        %s472 = scalar_lea.vmem [#allocation8], %s471
        %s473 = sand.u32 %s28, 1
        %s474 = scalar_lea.sflag [#allocation9], %s473
        %s475 = sand.u32 %s173, 1
        %s476 = smul.addr %s475, 4
        %s477 = scalar_lea.vmem [#allocation10], %s476
        // Predicated region
        $region41: #{tpu_custom_call.1} parent=27 // pred_check
          %p478 = pneg %p127
        $region42: #{tpu_custom_call.1} parent=27 // pred_check_branch
          %480 = sbr.rel (%p478) target = $region44
        $region43: #{tpu_custom_call.1} parent=27 // pred_region
          %s482 = ssub.s32 64, 64
          %483 = vsyncadd %s464, %s482
          %s484 = sadd.s32 %s34, %s33
          %s485 = smul.addr %s484, 64
          %s486 = scalar_lea.hbm %s2, %s485
          %s488 = sshll.u32 %s467, 4
          %s489 = int_to_ptr.vmem [resolvable:$true] %s488
          %491 = dma.vmem_to_hbm [thread:$0]  %s489, 64, %s486, %s464
        $region44: #{tpu_custom_call.1} parent=27 // pred_fallthru
          _
        // Predicated region
        $region45: #{tpu_custom_call.1} parent=27 // pred_check
          %p492 = pneg %p155
        $region46: #{tpu_custom_call.1} parent=27 // pred_check_branch
          %494 = sbr.rel (%p492) target = $region48
        $region47: #{tpu_custom_call.1} parent=27 // pred_region
          %s496 = ssub.s32 64, 64
          %497 = vsyncadd %s469, %s496
          %s498 = sadd.s32 %s34, %s33
          %s499 = smul.addr %s498, 64
          %s500 = scalar_lea.hbm %s3, %s499
          %s502 = sshll.u32 %s472, 4
          %s503 = int_to_ptr.vmem [resolvable:$true] %s502
          %505 = dma.vmem_to_hbm [thread:$0]  %s503, 64, %s500, %s469
        $region48: #{tpu_custom_call.1} parent=27 // pred_fallthru
          _
        // Predicated region
        $region49: #{tpu_custom_call.1} parent=27 // pred_check
          %p506 = pneg %p183
        $region50: #{tpu_custom_call.1} parent=27 // pred_check_branch
          %508 = sbr.rel (%p506) target = $region52
        $region51: #{tpu_custom_call.1} parent=27 // pred_region
          %s510 = ssub.s32 64, 64
          %511 = vsyncadd %s474, %s510
          %s512 = sadd.s32 %s34, %s33
          %s513 = smul.addr %s512, 64
          %s514 = scalar_lea.hbm %s4, %s513
          %s516 = sshll.u32 %s477, 4
          %s517 = int_to_ptr.vmem [resolvable:$true] %s516
          %519 = dma.vmem_to_hbm [thread:$0]  %s517, 64, %s514, %s474
        $region52: #{tpu_custom_call.1} parent=27 // pred_fallthru
          _
      $region28: #{tpu_custom_call.1} parent=5 // pred_fallthru
        _
      %p520 = scmp.le.s32.totalorder 2, %s23
      // Predicated region
      $region53: #{tpu_custom_call.1} parent=5 // pred_check
        %p521 = pneg %p520
      $region54: #{tpu_custom_call.1} parent=5 // pred_check_branch
        %523 = sbr.rel (%p521) target = $region56
      $region55: #{tpu_custom_call.1} parent=5 // pred_region
        %s524 = ssub.s32 %s23, 2
        // Predicated region
        $region57: #{tpu_custom_call.1} parent=55 // pred_check
          %p525 = pneg %p133
        $region58: #{tpu_custom_call.1} parent=55 // pred_check_branch
          %527 = sbr.rel (%p525) target = $region60
        $region59: #{tpu_custom_call.1} parent=55 // pred_region
          %s528 = sand.u32 %s118, 1
          %s529 = scalar_lea.sflag [#allocation4], %s528
          %s530 = sand.u32 %s118, 1
          %s531 = smul.addr %s530, 4
          %s532 = scalar_lea.vmem [#allocation7], %s531
          %533 = dma.done %s529, 64
        $region60: #{tpu_custom_call.1} parent=55 // pred_fallthru
          _
        // Predicated region
        $region61: #{tpu_custom_call.1} parent=55 // pred_check
          %p534 = pneg %p161
        $region62: #{tpu_custom_call.1} parent=55 // pred_check_branch
          %536 = sbr.rel (%p534) target = $region64
        $region63: #{tpu_custom_call.1} parent=55 // pred_region
          %s537 = sand.u32 %s29, 1
          %s538 = scalar_lea.sflag [#allocation9], %s537
          %s539 = sand.u32 %s146, 1
          %s540 = smul.addr %s539, 4
          %s541 = scalar_lea.vmem [#allocation8], %s540
          %542 = dma.done %s538, 64
        $region64: #{tpu_custom_call.1} parent=55 // pred_fallthru
          _
        // Predicated region
        $region65: #{tpu_custom_call.1} parent=55 // pred_check
          %p543 = pneg %p189
        $region66: #{tpu_custom_call.1} parent=55 // pred_check_branch
          %545 = sbr.rel (%p543) target = $region68
        $region67: #{tpu_custom_call.1} parent=55 // pred_region
          %s546 = sand.u32 %s29, 1
          %s547 = scalar_lea.sflag [#allocation9], %s546
          %s548 = sand.u32 %s174, 1
          %s549 = smul.addr %s548, 4
          %s550 = scalar_lea.vmem [#allocation10], %s549
          %551 = dma.done %s547, 64
        $region68: #{tpu_custom_call.1} parent=55 // pred_fallthru
          _
      $region56: #{tpu_custom_call.1} parent=5 // pred_fallthru
        _
    $region6: #{tpu_custom_call.1} parent=1 // loop_footer
      %s27 = sadd.s32 1, %s23
    $region7: #{tpu_custom_call.1} parent=1 // loop_footer_branch
      %22 = sbr.rel target = $region3
    $region8: #{tpu_custom_call.1} parent=1 // loop_exit
      _
    %552 = vsyncpa [#allocation3], 1
    %s553 = scalar_lea.sflag [#allocation3], 1
    %554 = vsyncpa %s553, 1
    %555 = vsyncpa [#allocation6], 1
    %s556 = scalar_lea.sflag [#allocation6], 1
    %557 = vsyncpa %s556, 1
    %558 = vsyncpa [#allocation4], 1
    %s559 = scalar_lea.sflag [#allocation4], 1
    %560 = vsyncpa %s559, 1
    %561 = vsyncpa [#allocation9], 1
    %s562 = scalar_lea.sflag [#allocation9], 1
    %563 = vsyncpa %s562, 1

</llo_original>
